<compile_context>
chip_gen: v6e
topology: v6e:2x2x1
jax: 0.10.0
libtpu: 0.0.40
codegen_flags: <defaults>
</compile_context>

<pallas_src>
import functools

import jax
import jax.numpy as jnp
from jax.experimental import pallas as pl
from jax.experimental.pallas import tpu as pltpu


# ----------------------------------------------------------------------------
# Kernel
# ----------------------------------------------------------------------------
def _layernorm(x, gamma, beta, eps=1e-5):
    mu = jnp.mean(x, axis=-1, keepdims=True)
    var = jnp.mean((x - mu) ** 2, axis=-1, keepdims=True)
    return (x - mu) * jax.lax.rsqrt(var + eps) * gamma + beta


def mapping_kernel(x_ref, wqkv_ref, bqkv_ref, wo_ref, vecs_ref,
                   w1_ref, b1_ref, w2_ref, wm_ref, bm_ref, o_ref,
                   *, n_heads):
    num_layers = wqkv_ref.shape[0]

    x = x_ref[...].astype(jnp.float32)                      # (S, E)
    s, e = x.shape
    hd = e // n_heads

    for l in range(num_layers):                             # static unroll
        vec = vecs_ref[l]                                   # (6, E) small params
        bo, ln1_g, ln1_b = vec[0:1], vec[1:2], vec[2:3]
        ln2_g, ln2_b, b2 = vec[3:4], vec[4:5], vec[5:6]

        # --- fused QKV: single (S,E)@(E,3E) matmul, 1/sqrt(hd) folded into Q -
        qkv = jnp.dot(x, wqkv_ref[l],
                      preferred_element_type=jnp.float32) + bqkv_ref[l]

        if s == 1:
            # softmax over a length-1 key axis is exactly identity: ctx == v
            # (v is already head-concatenated in the last E lanes of qkv).
            ctx = qkv[:, 2 * e:]                            # (1, E)
        else:
            # --- multi-head attention, batched over the head axis ------------
            q = jnp.transpose(qkv[:, :e].reshape(s, n_heads, hd), (1, 0, 2))
            k = jnp.transpose(qkv[:, e:2 * e].reshape(s, n_heads, hd), (1, 0, 2))
            v = jnp.transpose(qkv[:, 2 * e:].reshape(s, n_heads, hd), (1, 0, 2))

            sc = jnp.einsum('hqd,hkd->hqk', q, k,
                            preferred_element_type=jnp.float32)
            sc = sc - jnp.max(sc, axis=-1, keepdims=True)
            p = jnp.exp(sc)
            p = p / jnp.sum(p, axis=-1, keepdims=True)      # exact softmax
            ctx = jnp.einsum('hqk,hkd->hqd', p, v,
                             preferred_element_type=jnp.float32)   # (H, S, hd)
            ctx = jnp.transpose(ctx, (1, 0, 2)).reshape(s, e)      # (S, E)

        # --- output projection: single (S,E)@(E,E) matmul ---------------------
        attn = jnp.dot(ctx, wo_ref[l],
                       preferred_element_type=jnp.float32) + bo

        # --- post-LN residual 1 ----------------------------------------------
        h1 = _layernorm(x + attn, ln1_g, ln1_b)

        # --- feed-forward (ReLU) ----------------------------------------------
        ff = jnp.dot(h1, w1_ref[l],
                     preferred_element_type=jnp.float32) + b1_ref[l]
        ff = jnp.maximum(ff, 0.0)
        ff = jnp.dot(ff, w2_ref[l],
                     preferred_element_type=jnp.float32) + b2

        # --- post-LN residual 2 ----------------------------------------------
        x = _layernorm(h1 + ff, ln2_g, ln2_b)

    # --- mapper: the single, lane-dense HBM store (last dim = ep_len*E*fe) --
    o_ref[...] = (jnp.dot(x, wm_ref[...], preferred_element_type=jnp.float32)
                  + bm_ref[...]).astype(o_ref.dtype)


# ----------------------------------------------------------------------------
# Wrapper
# ----------------------------------------------------------------------------
_VMEM = pl.BlockSpec(memory_space=pltpu.MemorySpace.VMEM)


def mapping_forward(img_embedded, packed, *, ep_len, n_heads,
                    forward_expansion, train_mode=False):
    x = img_embedded.astype(jnp.float32)                    # (S, E)
    s, e = x.shape
    m = packed["wm"].shape[1]                               # ep_len * E * fe

    kernel = functools.partial(mapping_kernel, n_heads=n_heads)
    y = pl.pallas_call(
        kernel,
        out_shape=jax.ShapeDtypeStruct((s, m), jnp.float32),
        in_specs=[_VMEM] * 10,
        out_specs=_VMEM,
    )(x, packed["wqkv"], packed["bqkv"], packed["wo"], packed["vecs"],
      packed["w1"], packed["b1"], packed["w2"], packed["wm"], packed["bm"])

    if train_mode:
        return y.reshape(-1, ep_len, e * forward_expansion)
    return y.reshape(ep_len, e * forward_expansion)


# ----------------------------------------------------------------------------
# One-time packing of the natural (PyTorch-like) params into the fused kernel
# layout.  Keeps natural (E, 3E)/(E, E)/(E, F)/(F, E) weight matrices (one
# matmul each); folds the attention scale into the Q columns; consolidates the
# six (1, E) per-layer vectors into one (L, 6, E) array.
# ----------------------------------------------------------------------------
def pack_params(params, *, n_heads):
    layers = params["layers"]
    e = layers[0]["wo"].shape[0]
    hd = e // n_heads
    scale = 1.0 / float(hd) ** 0.5

    def per_layer(lyr):
        wqkv = lyr["wqkv"].at[:, :e].multiply(scale)        # fold 1/sqrt(hd)
        bqkv = lyr["bqkv"].at[:, :e].multiply(scale)
        vecs = jnp.concatenate(
            [lyr["bo"], lyr["ln1_g"], lyr["ln1_b"],
             lyr["ln2_g"], lyr["ln2_b"], lyr["b2"]], axis=0)  # (6, E)
        return dict(wqkv=wqkv, bqkv=bqkv, wo=lyr["wo"], vecs=vecs,
                    w1=lyr["w1"], b1=lyr["b1"], w2=lyr["w2"])

    per = [per_layer(lyr) for lyr in layers]
    packed = {k: jnp.stack([p[k] for p in per]) for k in per[0]}
    packed["wm"] = params["wm"]
    packed["bm"] = params["bm"]
    return packed


# ----------------------------------------------------------------------------
# Pure-JAX reference (natural params, exact softmax) for correctness checking
# ----------------------------------------------------------------------------
def mapping_reference(x, params, *, ep_len, n_heads, forward_expansion,
                      train_mode=False):
    e = x.shape[-1]
    hd = e // n_heads
    x = x.astype(jnp.float32)
    for lyr in params["layers"]:
        qkv = x @ lyr["wqkv"] + lyr["bqkv"]
        q, k, v = qkv[:, :e], qkv[:, e:2 * e], qkv[:, 2 * e:]
        outs = []
        for h in range(n_heads):
            sl = slice(h * hd, (h + 1) * hd)
            s = (q[:, sl] @ k[:, sl].T) / (hd ** 0.5)
            p = jax.nn.softmax(s, axis=-1)
            outs.append(p @ v[:, sl])
        attn = jnp.concatenate(outs, axis=-1) @ lyr["wo"] + lyr["bo"]
        x = _layernorm(x + attn, lyr["ln1_g"], lyr["ln1_b"])
        ff = jnp.maximum(x @ lyr["w1"] + lyr["b1"], 0.0) @ lyr["w2"] + lyr["b2"]
        x = _layernorm(x + ff, lyr["ln2_g"], lyr["ln2_b"])
    y = x @ params["wm"] + params["bm"]
    if train_mode:
        return y.reshape(-1, ep_len, e * forward_expansion)
    return y.reshape(ep_len, e * forward_expansion)


# ----------------------------------------------------------------------------
# Deterministic parameter construction (kaiming-normal weights, zero bias,
# unit LayerNorm) — synthetic, no checkpoint load.
# ----------------------------------------------------------------------------
def init_params(key, *, num_layers, embed_size, forward_expansion, ep_len):
    e = embed_size
    f = e * forward_expansion
    m = ep_len * e * forward_expansion

    def kaiming(k, fan_in, fan_out):
        # stored as (in, out) so kernels compute x @ W
        return jax.random.normal(k, (fan_in, fan_out), jnp.float32) * \
            (2.0 / fan_in) ** 0.5

    keys = jax.random.split(key, num_layers * 4 + 1)
    layers = []
    for l in range(num_layers):
        k0, k1, k2, k3 = keys[4 * l:4 * l + 4]
        layers.append(dict(
            wqkv=kaiming(k0, e, 3 * e), bqkv=jnp.zeros((1, 3 * e), jnp.float32),
            wo=kaiming(k1, e, e),       bo=jnp.zeros((1, e), jnp.float32),
            ln1_g=jnp.ones((1, e), jnp.float32),
            ln1_b=jnp.zeros((1, e), jnp.float32),
            ln2_g=jnp.ones((1, e), jnp.float32),
            ln2_b=jnp.zeros((1, e), jnp.float32),
            w1=kaiming(k2, e, f), b1=jnp.zeros((1, f), jnp.float32),
            w2=kaiming(k3, f, e), b2=jnp.zeros((1, e), jnp.float32),
        ))
    wm = kaiming(keys[-1], e, m)
    return dict(layers=layers, wm=wm, bm=jnp.zeros((1, m), jnp.float32))


# ----------------------------------------------------------------------------
if __name__ == "__main__":
    # small, module-consistent config
    EP_LEN, NUM_LAYERS, EMBED, N_HEADS, FWD_EXP = 4, 2, 32, 4, 2

    key = jax.random.PRNGKey(0)
    kp, kx, kxt = jax.random.split(key, 3)
    params = init_params(kp, num_layers=NUM_LAYERS, embed_size=EMBED,
                         forward_expansion=FWD_EXP, ep_len=EP_LEN)
    packed = pack_params(params, n_heads=N_HEADS)

    # inference path: single image embedding token (S=1, E)
    img_embedded = jax.random.normal(kx, (1, EMBED), jnp.float32)
    out = mapping_forward(img_embedded, packed, ep_len=EP_LEN, n_heads=N_HEADS,
                          forward_expansion=FWD_EXP, train_mode=False)
    out = jax.block_until_ready(out)
    ref = mapping_reference(img_embedded, params, ep_len=EP_LEN,
                            n_heads=N_HEADS, forward_expansion=FWD_EXP,
                            train_mode=False)
    assert out.shape == (EP_LEN, EMBED * FWD_EXP), out.shape
    err = float(jnp.max(jnp.abs(out - ref)))
    assert err < 1e-3, err

    # train path: batch of 2 embeddings -> (-1, ep_len, E*fe)
    # (fed as a length-2 sequence, matching PyTorch's unbatched (seq, d_model)
    #  interpretation of a (B, E) input)
    img_train = jax.random.normal(kxt, (2, EMBED), jnp.float32)
    out_t = mapping_forward(img_train, packed, ep_len=EP_LEN, n_heads=N_HEADS,
                            forward_expansion=FWD_EXP, train_mode=True)
    out_t = jax.block_until_ready(out_t)
    ref_t = mapping_reference(img_train, params, ep_len=EP_LEN,
                              n_heads=N_HEADS, forward_expansion=FWD_EXP,
                              train_mode=True)
    assert out_t.shape == (2, EP_LEN, EMBED * FWD_EXP), out_t.shape
    err_t = float(jnp.max(jnp.abs(out_t - ref_t)))
    assert err_t < 1e-3, err_t

    print("KERNEL_OK")
</pallas_src>

<mosaic_0001>
module attributes {stable_mosaic.version = 11 : i64} {
  func.func @mapping_kernel(%arg0: memref<1x32xf32, #tpu.memory_space<vmem>>, %arg1: memref<2x32x96xf32, #tpu.memory_space<vmem>>, %arg2: memref<2x1x96xf32, #tpu.memory_space<vmem>>, %arg3: memref<2x32x32xf32, #tpu.memory_space<vmem>>, %arg4: memref<2x6x32xf32, #tpu.memory_space<vmem>>, %arg5: memref<2x32x64xf32, #tpu.memory_space<vmem>>, %arg6: memref<2x1x64xf32, #tpu.memory_space<vmem>>, %arg7: memref<2x64x32xf32, #tpu.memory_space<vmem>>, %arg8: memref<32x256xf32, #tpu.memory_space<vmem>>, %arg9: memref<1x256xf32, #tpu.memory_space<vmem>>, %arg10: memref<1x256xf32, #tpu.memory_space<vmem>>) attributes {dimension_semantics = [], scalar_prefetch = 0 : i64, scratch_operands = 0 : i64, tpu.core_type = #tpu.core_type<tc>} {
    %c0 = arith.constant 0 : index
    %c0_0 = arith.constant 0 : index
    %0 = vector.load %arg0[%c0, %c0_0] : memref<1x32xf32, #tpu.memory_space<vmem>>, vector<1x32xf32>
    %c0_1 = arith.constant 0 : index
    %c0_2 = arith.constant 0 : index
    %c0_3 = arith.constant 0 : index
    %1 = vector.load %arg4[%c0_1, %c0_2, %c0_3] : memref<2x6x32xf32, #tpu.memory_space<vmem>>, vector<1x6x32xf32>
    %2 = vector.shape_cast %1 : vector<1x6x32xf32> to vector<6x32xf32>
    %3 = vector.extract_strided_slice %2 {offsets = [0, 0], sizes = [1, 32], strides = [1, 1]} : vector<6x32xf32> to vector<1x32xf32>
    %4 = vector.extract_strided_slice %2 {offsets = [1, 0], sizes = [1, 32], strides = [1, 1]} : vector<6x32xf32> to vector<1x32xf32>
    %5 = vector.extract_strided_slice %2 {offsets = [2, 0], sizes = [1, 32], strides = [1, 1]} : vector<6x32xf32> to vector<1x32xf32>
    %6 = vector.extract_strided_slice %2 {offsets = [3, 0], sizes = [1, 32], strides = [1, 1]} : vector<6x32xf32> to vector<1x32xf32>
    %7 = vector.extract_strided_slice %2 {offsets = [4, 0], sizes = [1, 32], strides = [1, 1]} : vector<6x32xf32> to vector<1x32xf32>
    %8 = vector.extract_strided_slice %2 {offsets = [5, 0], sizes = [1, 32], strides = [1, 1]} : vector<6x32xf32> to vector<1x32xf32>
    %c0_4 = arith.constant 0 : index
    %c0_5 = arith.constant 0 : index
    %c0_6 = arith.constant 0 : index
    %9 = vector.load %arg1[%c0_4, %c0_5, %c0_6] : memref<2x32x96xf32, #tpu.memory_space<vmem>>, vector<1x32x96xf32>
    %10 = vector.shape_cast %9 : vector<1x32x96xf32> to vector<32x96xf32>
    %cst = arith.constant dense<0.000000e+00> : vector<1x96xf32>
    %11 = tpu.matmul %0, %10, %cst {dimension_numbers = #tpu.dot_dimension_numbers<[1], [0], [0], [1], [0, 0, 1, 1], [], []>} : vector<1x32xf32>, vector<32x96xf32>, vector<1x96xf32> -> vector<1x96xf32>
    %c0_7 = arith.constant 0 : index
    %c0_8 = arith.constant 0 : index
    %c0_9 = arith.constant 0 : index
    %12 = vector.load %arg2[%c0_7, %c0_8, %c0_9] : memref<2x1x96xf32, #tpu.memory_space<vmem>>, vector<1x1x96xf32>
    %13 = vector.shape_cast %12 : vector<1x1x96xf32> to vector<1x96xf32>
    %14 = arith.addf %11, %13 : vector<1x96xf32>
    %15 = vector.extract_strided_slice %14 {offsets = [0, 64], sizes = [1, 32], strides = [1, 1]} : vector<1x96xf32> to vector<1x32xf32>
    %c0_10 = arith.constant 0 : index
    %c0_11 = arith.constant 0 : index
    %c0_12 = arith.constant 0 : index
    %16 = vector.load %arg3[%c0_10, %c0_11, %c0_12] : memref<2x32x32xf32, #tpu.memory_space<vmem>>, vector<1x32x32xf32>
    %17 = vector.shape_cast %16 : vector<1x32x32xf32> to vector<32x32xf32>
    %cst_13 = arith.constant dense<0.000000e+00> : vector<1x32xf32>
    %18 = tpu.matmul %15, %17, %cst_13 {dimension_numbers = #tpu.dot_dimension_numbers<[1], [0], [0], [1], [0, 0, 1, 1], [], []>} : vector<1x32xf32>, vector<32x32xf32>, vector<1x32xf32> -> vector<1x32xf32>
    %19 = arith.addf %18, %3 : vector<1x32xf32>
    %20 = arith.addf %0, %19 : vector<1x32xf32>
    %cst_14 = arith.constant dense<0.000000e+00> : vector<1xf32>
    %21 = vector.multi_reduction <add>, %20, %cst_14 [1] : vector<1x32xf32> to vector<1xf32>
    %22 = vector.shape_cast %21 : vector<1xf32> to vector<1x1xf32>
    %cst_15 = arith.constant 3.200000e+01 : f32
    %23 = vector.broadcast %cst_15 : f32 to vector<1x1xf32>
    %24 = arith.divf %22, %23 : vector<1x1xf32>
    %25 = vector.broadcast %24 : vector<1x1xf32> to vector<1x32xf32>
    %26 = arith.subf %20, %25 : vector<1x32xf32>
    %27 = arith.mulf %26, %26 : vector<1x32xf32>
    %cst_16 = arith.constant dense<0.000000e+00> : vector<1xf32>
    %28 = vector.multi_reduction <add>, %27, %cst_16 [1] : vector<1x32xf32> to vector<1xf32>
    %29 = vector.shape_cast %28 : vector<1xf32> to vector<1x1xf32>
    %cst_17 = arith.constant 3.200000e+01 : f32
    %30 = vector.broadcast %cst_17 : f32 to vector<1x1xf32>
    %31 = arith.divf %29, %30 : vector<1x1xf32>
    %32 = vector.broadcast %24 : vector<1x1xf32> to vector<1x32xf32>
    %33 = arith.subf %20, %32 : vector<1x32xf32>
    %cst_18 = arith.constant 9.99999974E-6 : f32
    %34 = vector.broadcast %cst_18 : f32 to vector<1x1xf32>
    %35 = arith.addf %31, %34 : vector<1x1xf32>
    %36 = math.rsqrt %35 : vector<1x1xf32>
    %37 = vector.broadcast %36 : vector<1x1xf32> to vector<1x32xf32>
    %38 = arith.mulf %33, %37 : vector<1x32xf32>
    %39 = arith.mulf %38, %4 : vector<1x32xf32>
    %40 = arith.addf %39, %5 : vector<1x32xf32>
    %c0_19 = arith.constant 0 : index
    %c0_20 = arith.constant 0 : index
    %c0_21 = arith.constant 0 : index
    %41 = vector.load %arg5[%c0_19, %c0_20, %c0_21] : memref<2x32x64xf32, #tpu.memory_space<vmem>>, vector<1x32x64xf32>
    %42 = vector.shape_cast %41 : vector<1x32x64xf32> to vector<32x64xf32>
    %cst_22 = arith.constant dense<0.000000e+00> : vector<1x64xf32>
    %43 = tpu.matmul %40, %42, %cst_22 {dimension_numbers = #tpu.dot_dimension_numbers<[1], [0], [0], [1], [0, 0, 1, 1], [], []>} : vector<1x32xf32>, vector<32x64xf32>, vector<1x64xf32> -> vector<1x64xf32>
    %c0_23 = arith.constant 0 : index
    %c0_24 = arith.constant 0 : index
    %c0_25 = arith.constant 0 : index
    %44 = vector.load %arg6[%c0_23, %c0_24, %c0_25] : memref<2x1x64xf32, #tpu.memory_space<vmem>>, vector<1x1x64xf32>
    %45 = vector.shape_cast %44 : vector<1x1x64xf32> to vector<1x64xf32>
    %46 = arith.addf %43, %45 : vector<1x64xf32>
    %cst_26 = arith.constant 0.000000e+00 : f32
    %47 = vector.broadcast %cst_26 : f32 to vector<1x64xf32>
    %48 = arith.maximumf %46, %47 : vector<1x64xf32>
    %c0_27 = arith.constant 0 : index
    %c0_28 = arith.constant 0 : index
    %c0_29 = arith.constant 0 : index
    %49 = vector.load %arg7[%c0_27, %c0_28, %c0_29] : memref<2x64x32xf32, #tpu.memory_space<vmem>>, vector<1x64x32xf32>
    %50 = vector.shape_cast %49 : vector<1x64x32xf32> to vector<64x32xf32>
    %cst_30 = arith.constant dense<0.000000e+00> : vector<1x32xf32>
    %51 = tpu.matmul %48, %50, %cst_30 {dimension_numbers = #tpu.dot_dimension_numbers<[1], [0], [0], [1], [0, 0, 1, 1], [], []>} : vector<1x64xf32>, vector<64x32xf32>, vector<1x32xf32> -> vector<1x32xf32>
    %52 = arith.addf %51, %8 : vector<1x32xf32>
    %53 = arith.addf %40, %52 : vector<1x32xf32>
    %cst_31 = arith.constant dense<0.000000e+00> : vector<1xf32>
    %54 = vector.multi_reduction <add>, %53, %cst_31 [1] : vector<1x32xf32> to vector<1xf32>
    %55 = vector.shape_cast %54 : vector<1xf32> to vector<1x1xf32>
    %cst_32 = arith.constant 3.200000e+01 : f32
    %56 = vector.broadcast %cst_32 : f32 to vector<1x1xf32>
    %57 = arith.divf %55, %56 : vector<1x1xf32>
    %58 = vector.broadcast %57 : vector<1x1xf32> to vector<1x32xf32>
    %59 = arith.subf %53, %58 : vector<1x32xf32>
    %60 = arith.mulf %59, %59 : vector<1x32xf32>
    %cst_33 = arith.constant dense<0.000000e+00> : vector<1xf32>
    %61 = vector.multi_reduction <add>, %60, %cst_33 [1] : vector<1x32xf32> to vector<1xf32>
    %62 = vector.shape_cast %61 : vector<1xf32> to vector<1x1xf32>
    %cst_34 = arith.constant 3.200000e+01 : f32
    %63 = vector.broadcast %cst_34 : f32 to vector<1x1xf32>
    %64 = arith.divf %62, %63 : vector<1x1xf32>
    %65 = vector.broadcast %57 : vector<1x1xf32> to vector<1x32xf32>
    %66 = arith.subf %53, %65 : vector<1x32xf32>
    %cst_35 = arith.constant 9.99999974E-6 : f32
    %67 = vector.broadcast %cst_35 : f32 to vector<1x1xf32>
    %68 = arith.addf %64, %67 : vector<1x1xf32>
    %69 = math.rsqrt %68 : vector<1x1xf32>
    %70 = vector.broadcast %69 : vector<1x1xf32> to vector<1x32xf32>
    %71 = arith.mulf %66, %70 : vector<1x32xf32>
    %72 = arith.mulf %71, %6 : vector<1x32xf32>
    %73 = arith.addf %72, %7 : vector<1x32xf32>
    %c1 = arith.constant 1 : index
    %c0_36 = arith.constant 0 : index
    %c0_37 = arith.constant 0 : index
    %74 = vector.load %arg4[%c1, %c0_36, %c0_37] : memref<2x6x32xf32, #tpu.memory_space<vmem>>, vector<1x6x32xf32>
    %75 = vector.shape_cast %74 : vector<1x6x32xf32> to vector<6x32xf32>
    %76 = vector.extract_strided_slice %75 {offsets = [0, 0], sizes = [1, 32], strides = [1, 1]} : vector<6x32xf32> to vector<1x32xf32>
    %77 = vector.extract_strided_slice %75 {offsets = [1, 0], sizes = [1, 32], strides = [1, 1]} : vector<6x32xf32> to vector<1x32xf32>
    %78 = vector.extract_strided_slice %75 {offsets = [2, 0], sizes = [1, 32], strides = [1, 1]} : vector<6x32xf32> to vector<1x32xf32>
    %79 = vector.extract_strided_slice %75 {offsets = [3, 0], sizes = [1, 32], strides = [1, 1]} : vector<6x32xf32> to vector<1x32xf32>
    %80 = vector.extract_strided_slice %75 {offsets = [4, 0], sizes = [1, 32], strides = [1, 1]} : vector<6x32xf32> to vector<1x32xf32>
    %81 = vector.extract_strided_slice %75 {offsets = [5, 0], sizes = [1, 32], strides = [1, 1]} : vector<6x32xf32> to vector<1x32xf32>
    %c1_38 = arith.constant 1 : index
    %c0_39 = arith.constant 0 : index
    %c0_40 = arith.constant 0 : index
    %82 = vector.load %arg1[%c1_38, %c0_39, %c0_40] : memref<2x32x96xf32, #tpu.memory_space<vmem>>, vector<1x32x96xf32>
    %83 = vector.shape_cast %82 : vector<1x32x96xf32> to vector<32x96xf32>
    %cst_41 = arith.constant dense<0.000000e+00> : vector<1x96xf32>
    %84 = tpu.matmul %73, %83, %cst_41 {dimension_numbers = #tpu.dot_dimension_numbers<[1], [0], [0], [1], [0, 0, 1, 1], [], []>} : vector<1x32xf32>, vector<32x96xf32>, vector<1x96xf32> -> vector<1x96xf32>
    %c1_42 = arith.constant 1 : index
    %c0_43 = arith.constant 0 : index
    %c0_44 = arith.constant 0 : index
    %85 = vector.load %arg2[%c1_42, %c0_43, %c0_44] : memref<2x1x96xf32, #tpu.memory_space<vmem>>, vector<1x1x96xf32>
    %86 = vector.shape_cast %85 : vector<1x1x96xf32> to vector<1x96xf32>
    %87 = arith.addf %84, %86 : vector<1x96xf32>
    %88 = vector.extract_strided_slice %87 {offsets = [0, 64], sizes = [1, 32], strides = [1, 1]} : vector<1x96xf32> to vector<1x32xf32>
    %c1_45 = arith.constant 1 : index
    %c0_46 = arith.constant 0 : index
    %c0_47 = arith.constant 0 : index
    %89 = vector.load %arg3[%c1_45, %c0_46, %c0_47] : memref<2x32x32xf32, #tpu.memory_space<vmem>>, vector<1x32x32xf32>
    %90 = vector.shape_cast %89 : vector<1x32x32xf32> to vector<32x32xf32>
    %cst_48 = arith.constant dense<0.000000e+00> : vector<1x32xf32>
    %91 = tpu.matmul %88, %90, %cst_48 {dimension_numbers = #tpu.dot_dimension_numbers<[1], [0], [0], [1], [0, 0, 1, 1], [], []>} : vector<1x32xf32>, vector<32x32xf32>, vector<1x32xf32> -> vector<1x32xf32>
    %92 = arith.addf %91, %76 : vector<1x32xf32>
    %93 = arith.addf %73, %92 : vector<1x32xf32>
    %cst_49 = arith.constant dense<0.000000e+00> : vector<1xf32>
    %94 = vector.multi_reduction <add>, %93, %cst_49 [1] : vector<1x32xf32> to vector<1xf32>
    %95 = vector.shape_cast %94 : vector<1xf32> to vector<1x1xf32>
    %cst_50 = arith.constant 3.200000e+01 : f32
    %96 = vector.broadcast %cst_50 : f32 to vector<1x1xf32>
    %97 = arith.divf %95, %96 : vector<1x1xf32>
    %98 = vector.broadcast %97 : vector<1x1xf32> to vector<1x32xf32>
    %99 = arith.subf %93, %98 : vector<1x32xf32>
    %100 = arith.mulf %99, %99 : vector<1x32xf32>
    %cst_51 = arith.constant dense<0.000000e+00> : vector<1xf32>
    %101 = vector.multi_reduction <add>, %100, %cst_51 [1] : vector<1x32xf32> to vector<1xf32>
    %102 = vector.shape_cast %101 : vector<1xf32> to vector<1x1xf32>
    %cst_52 = arith.constant 3.200000e+01 : f32
    %103 = vector.broadcast %cst_52 : f32 to vector<1x1xf32>
    %104 = arith.divf %102, %103 : vector<1x1xf32>
    %105 = vector.broadcast %97 : vector<1x1xf32> to vector<1x32xf32>
    %106 = arith.subf %93, %105 : vector<1x32xf32>
    %cst_53 = arith.constant 9.99999974E-6 : f32
    %107 = vector.broadcast %cst_53 : f32 to vector<1x1xf32>
    %108 = arith.addf %104, %107 : vector<1x1xf32>
    %109 = math.rsqrt %108 : vector<1x1xf32>
    %110 = vector.broadcast %109 : vector<1x1xf32> to vector<1x32xf32>
    %111 = arith.mulf %106, %110 : vector<1x32xf32>
    %112 = arith.mulf %111, %77 : vector<1x32xf32>
    %113 = arith.addf %112, %78 : vector<1x32xf32>
    %c1_54 = arith.constant 1 : index
    %c0_55 = arith.constant 0 : index
    %c0_56 = arith.constant 0 : index
    %114 = vector.load %arg5[%c1_54, %c0_55, %c0_56] : memref<2x32x64xf32, #tpu.memory_space<vmem>>, vector<1x32x64xf32>
    %115 = vector.shape_cast %114 : vector<1x32x64xf32> to vector<32x64xf32>
    %cst_57 = arith.constant dense<0.000000e+00> : vector<1x64xf32>
    %116 = tpu.matmul %113, %115, %cst_57 {dimension_numbers = #tpu.dot_dimension_numbers<[1], [0], [0], [1], [0, 0, 1, 1], [], []>} : vector<1x32xf32>, vector<32x64xf32>, vector<1x64xf32> -> vector<1x64xf32>
    %c1_58 = arith.constant 1 : index
    %c0_59 = arith.constant 0 : index
    %c0_60 = arith.constant 0 : index
    %117 = vector.load %arg6[%c1_58, %c0_59, %c0_60] : memref<2x1x64xf32, #tpu.memory_space<vmem>>, vector<1x1x64xf32>
    %118 = vector.shape_cast %117 : vector<1x1x64xf32> to vector<1x64xf32>
    %119 = arith.addf %116, %118 : vector<1x64xf32>
    %cst_61 = arith.constant 0.000000e+00 : f32
    %120 = vector.broadcast %cst_61 : f32 to vector<1x64xf32>
    %121 = arith.maximumf %119, %120 : vector<1x64xf32>
    %c1_62 = arith.constant 1 : index
    %c0_63 = arith.constant 0 : index
    %c0_64 = arith.constant 0 : index
    %122 = vector.load %arg7[%c1_62, %c0_63, %c0_64] : memref<2x64x32xf32, #tpu.memory_space<vmem>>, vector<1x64x32xf32>
    %123 = vector.shape_cast %122 : vector<1x64x32xf32> to vector<64x32xf32>
    %cst_65 = arith.constant dense<0.000000e+00> : vector<1x32xf32>
    %124 = tpu.matmul %121, %123, %cst_65 {dimension_numbers = #tpu.dot_dimension_numbers<[1], [0], [0], [1], [0, 0, 1, 1], [], []>} : vector<1x64xf32>, vector<64x32xf32>, vector<1x32xf32> -> vector<1x32xf32>
    %125 = arith.addf %124, %81 : vector<1x32xf32>
    %126 = arith.addf %113, %125 : vector<1x32xf32>
    %cst_66 = arith.constant dense<0.000000e+00> : vector<1xf32>
    %127 = vector.multi_reduction <add>, %126, %cst_66 [1] : vector<1x32xf32> to vector<1xf32>
    %128 = vector.shape_cast %127 : vector<1xf32> to vector<1x1xf32>
    %cst_67 = arith.constant 3.200000e+01 : f32
    %129 = vector.broadcast %cst_67 : f32 to vector<1x1xf32>
    %130 = arith.divf %128, %129 : vector<1x1xf32>
    %131 = vector.broadcast %130 : vector<1x1xf32> to vector<1x32xf32>
    %132 = arith.subf %126, %131 : vector<1x32xf32>
    %133 = arith.mulf %132, %132 : vector<1x32xf32>
    %cst_68 = arith.constant dense<0.000000e+00> : vector<1xf32>
    %134 = vector.multi_reduction <add>, %133, %cst_68 [1] : vector<1x32xf32> to vector<1xf32>
    %135 = vector.shape_cast %134 : vector<1xf32> to vector<1x1xf32>
    %cst_69 = arith.constant 3.200000e+01 : f32
    %136 = vector.broadcast %cst_69 : f32 to vector<1x1xf32>
    %137 = arith.divf %135, %136 : vector<1x1xf32>
    %138 = vector.broadcast %130 : vector<1x1xf32> to vector<1x32xf32>
    %139 = arith.subf %126, %138 : vector<1x32xf32>
    %cst_70 = arith.constant 9.99999974E-6 : f32
    %140 = vector.broadcast %cst_70 : f32 to vector<1x1xf32>
    %141 = arith.addf %137, %140 : vector<1x1xf32>
    %142 = math.rsqrt %141 : vector<1x1xf32>
    %143 = vector.broadcast %142 : vector<1x1xf32> to vector<1x32xf32>
    %144 = arith.mulf %139, %143 : vector<1x32xf32>
    %145 = arith.mulf %144, %79 : vector<1x32xf32>
    %146 = arith.addf %145, %80 : vector<1x32xf32>
    %c0_71 = arith.constant 0 : index
    %c0_72 = arith.constant 0 : index
    %147 = vector.load %arg8[%c0_71, %c0_72] : memref<32x256xf32, #tpu.memory_space<vmem>>, vector<32x256xf32>
    %cst_73 = arith.constant dense<0.000000e+00> : vector<1x256xf32>
    %148 = tpu.matmul %146, %147, %cst_73 {dimension_numbers = #tpu.dot_dimension_numbers<[1], [0], [0], [1], [0, 0, 1, 1], [], []>} : vector<1x32xf32>, vector<32x256xf32>, vector<1x256xf32> -> vector<1x256xf32>
    %c0_74 = arith.constant 0 : index
    %c0_75 = arith.constant 0 : index
    %149 = vector.load %arg9[%c0_74, %c0_75] : memref<1x256xf32, #tpu.memory_space<vmem>>, vector<1x256xf32>
    %150 = arith.addf %148, %149 : vector<1x256xf32>
    %c0_76 = arith.constant 0 : index
    %c0_77 = arith.constant 0 : index
    %151 = vector.load %arg10[%c0_76, %c0_77] : memref<1x256xf32, #tpu.memory_space<vmem>>, vector<1x256xf32>
    tpu.vector_store %arg10[%c0_76, %c0_77], %150 {strides = array<i32>} : memref<1x256xf32, #tpu.memory_space<vmem>>, vector<1x256xf32>,
    return
  }
}

</mosaic_0001>

<llo_original>
// kernel: tpu_custom_call.1
$region0: #{tpu_custom_call.1}
  #allocation0 [shape = 'u32[]', space=smem, size = 0x4, offset = 0x4, fixed_abs, tag = 'smem constant byte address 0x4 - core index']
  #allocation1 [shape = 'u32[144,128]{1,0:T(1,128)}', space=vmem, size = 0x12000, scoped, tag = 'internal scratch']
  %s0 = inlined_call_operand.vmem [shape: f32[1,32], index: 0, kind: input, shape index: {}]
  %s1 = inlined_call_operand.vmem [shape: f32[2,32,96], index: 1, kind: input, shape index: {}]
  %s2 = inlined_call_operand.vmem [shape: f32[2,1,96], index: 2, kind: input, shape index: {}]
  %s3 = inlined_call_operand.vmem [shape: f32[2,32,32], index: 3, kind: input, shape index: {}]
  %s4 = inlined_call_operand.vmem [shape: f32[2,6,32], index: 4, kind: input, shape index: {}]
  %s5 = inlined_call_operand.vmem [shape: f32[2,32,64], index: 5, kind: input, shape index: {}]
  %s6 = inlined_call_operand.vmem [shape: f32[2,1,64], index: 6, kind: input, shape index: {}]
  %s7 = inlined_call_operand.vmem [shape: f32[2,64,32], index: 7, kind: input, shape index: {}]
  %s8 = inlined_call_operand.hbm [shape: f32[32,256], index: 8, kind: input, shape index: {}]
  %s9 = inlined_call_operand.vmem [shape: f32[1,256], index: 9, kind: input, shape index: {}]
  %s10 = inlined_call_operand.hbm [shape: f32[1,256], index: 10, kind: output, shape index: {}]
  %s11 = sld [smem:[#allocation0]]
  $region54: #{tpu_custom_call.1} parent=0
    _
  %s13 = ssub.s32 1, %s11
  %s14 = scalar_select 0, %s13, %s11
  $region1: #{tpu_custom_call.1} parent=0
    #allocation2 [shape = 'u8[32768]{0}', space=vmem, size = 0x8000, scoped, tag = 'input window, operand 8, single buffered']
    #allocation3 [shape = 's32[1]{0}', space=sflag, size = 0x4, scoped, tag = 'scoped memory for tpu_custom_call.1']
    #allocation4 [shape = 's32[1]{0}', space=sflag, size = 0x4, scoped, tag = 'scoped memory for tpu_custom_call.1']
    #allocation5 [shape = 'u8[1024]{0}', space=vmem, size = 0x400, scoped, tag = 'output window, operand 0, single buffered']
    %15 = vsyncpa [#allocation3], 0
    %16 = vsyncpa [#allocation4], 0
    // Predicated region
    $region2: #{tpu_custom_call.1} parent=1 // pred_check
      _
    $region3: #{tpu_custom_call.1} parent=1 // pred_check_branch
      %18 = sbr.rel (0) target = $region5
    $region4: #{tpu_custom_call.1} parent=1 // pred_region
      _
    $region5: #{tpu_custom_call.1} parent=1 // pred_fallthru
      _
    // Predicated region
    $region6: #{tpu_custom_call.1} parent=1 // pred_check
      _
    $region7: #{tpu_custom_call.1} parent=1 // pred_check_branch
      %20 = sbr.rel (0) target = $region9
    $region8: #{tpu_custom_call.1} parent=1 // pred_region
      _
    $region9: #{tpu_custom_call.1} parent=1 // pred_fallthru
      _
    // Predicated region
    $region10: #{tpu_custom_call.1} parent=1 // pred_check
      _
    $region11: #{tpu_custom_call.1} parent=1 // pred_check_branch
      %22 = sbr.rel (0) target = $region13
    $region12: #{tpu_custom_call.1} parent=1 // pred_region
      _
    $region13: #{tpu_custom_call.1} parent=1 // pred_fallthru
      _
    // Predicated region
    $region14: #{tpu_custom_call.1} parent=1 // pred_check
      _
    $region15: #{tpu_custom_call.1} parent=1 // pred_check_branch
      %24 = sbr.rel (0) target = $region17
    $region16: #{tpu_custom_call.1} parent=1 // pred_region
      _
    $region17: #{tpu_custom_call.1} parent=1 // pred_fallthru
      _
    // Predicated region
    $region18: #{tpu_custom_call.1} parent=1 // pred_check
      _
    $region19: #{tpu_custom_call.1} parent=1 // pred_check_branch
      %26 = sbr.rel (0) target = $region21
    $region20: #{tpu_custom_call.1} parent=1 // pred_region
      _
    $region21: #{tpu_custom_call.1} parent=1 // pred_fallthru
      _
    // Predicated region
    $region22: #{tpu_custom_call.1} parent=1 // pred_check
      _
    $region23: #{tpu_custom_call.1} parent=1 // pred_check_branch
      %28 = sbr.rel (0) target = $region25
    $region24: #{tpu_custom_call.1} parent=1 // pred_region
      _
    $region25: #{tpu_custom_call.1} parent=1 // pred_fallthru
      _
    // Predicated region
    $region26: #{tpu_custom_call.1} parent=1 // pred_check
      _
    $region27: #{tpu_custom_call.1} parent=1 // pred_check_branch
      %30 = sbr.rel (0) target = $region29
    $region28: #{tpu_custom_call.1} parent=1 // pred_region
      _
    $region29: #{tpu_custom_call.1} parent=1 // pred_fallthru
      _
    // Predicated region
    $region30: #{tpu_custom_call.1} parent=1 // pred_check
      _
    $region31: #{tpu_custom_call.1} parent=1 // pred_check_branch
      %32 = sbr.rel (0) target = $region33
    $region32: #{tpu_custom_call.1} parent=1 // pred_region
      _
    $region33: #{tpu_custom_call.1} parent=1 // pred_fallthru
      _
    // Predicated region
    $region34: #{tpu_custom_call.1} parent=1 // pred_check
      _
    $region35: #{tpu_custom_call.1} parent=1 // pred_check_branch
      %34 = sbr.rel (0) target = $region37
    $region36: #{tpu_custom_call.1} parent=1 // pred_region
      %s36 = ssub.s32 1024, 1024
      %37 = vsyncadd [#allocation3], %s36
      %s38 = sshll.u32 [#allocation2], 4
      %s39 = int_to_ptr.vmem [resolvable:$true] %s38
      %44 = dma.hbm_to_vmem [thread:$0]  %s8, 1024, %s39, [#allocation3], 256, 256, 16
    $region37: #{tpu_custom_call.1} parent=1 // pred_fallthru
      _
    // Predicated region
    $region38: #{tpu_custom_call.1} parent=1 // pred_check
      _
    $region39: #{tpu_custom_call.1} parent=1 // pred_check_branch
      %46 = sbr.rel (0) target = $region41
    $region40: #{tpu_custom_call.1} parent=1 // pred_region
      _
    $region41: #{tpu_custom_call.1} parent=1 // pred_fallthru
      _
    // Predicated region
    $region42: #{tpu_custom_call.1} parent=1 // pred_check
      _
    $region43: #{tpu_custom_call.1} parent=1 // pred_check_branch
      %48 = sbr.rel (0) target = $region45
    $region44: #{tpu_custom_call.1} parent=1 // pred_region
      %49 = dma.done [#allocation3], 1024
    $region45: #{tpu_custom_call.1} parent=1 // pred_fallthru
      _
    %v50 = vld [vmem:[%s0] sm:$0x1]
    %v51 = vld [vmem:[%s4] sm:$0x3f]
    %v52 = vld [vmem:[%s1] sm:$0xff]
    %v53 = vld [vmem:[%s1 + $0x8] sm:$0xff]
    %v54 = vld [vmem:[%s1 + $0x10] sm:$0xff]
    %v55 = vld [vmem:[%s1 + $0x18] sm:$0xff]
    %v56 = vld [vmem:[%s2] sm:$0x1]
    %vm57 = vcmask 261120
    %v59 = vsel %vm57, %v50, 0
    %61 = vmatprep.subr.mxu0 0.0
    %62 = vmatpush1.msra.mxu0 0.0
    %63 = vmatprep.subr.mxu0 0.0
    %64 = vmatpush1.msra.mxu0 0.0
    %65 = vmatprep.subr.mxu0 0.0
    %66 = vmatpush1.msra.mxu0 0.0
    %67 = vmatprep.subr.mxu0 0.0
    %68 = vmatpush1.msra.mxu0 0.0
    %69 = vmatprep.subr.mxu0 0.0
    %70 = vmatpush1.msra.mxu0 0.0
    %71 = vmatprep.subr.mxu0 0.0
    %72 = vmatpush1.msra.mxu0 0.0
    %73 = vmatprep.subr.mxu0 0.0
    %74 = vmatpush1.msra.mxu0 0.0
    %75 = vmatprep.subr.mxu0 0.0
    %76 = vmatpush1.msra.mxu0 0.0
    %77 = vmatprep.subr.mxu0 0.0
    %78 = vmatpush1.msra.mxu0 0.0
    %79 = vmatprep.subr.mxu0 0.0
    %80 = vmatpush1.msra.mxu0 0.0
    %81 = vmatprep.subr.mxu0 0.0
    %82 = vmatpush1.msra.mxu0 0.0
    %83 = vmatprep.subr.mxu0 0.0
    %84 = vmatpush1.msra.mxu0 0.0
    %85 = vmatprep.subr.mxu0 0.0
    %86 = vmatpush1.msra.mxu0 %v55
    %87 = vmatprep.subr.mxu0 0.0
    %88 = vmatpush1.msra.mxu0 %v54
    %89 = vmatprep.subr.mxu0 0.0
    %90 = vmatpush1.msra.mxu0 %v53
    %91 = vmatprep.subr.mxu0 0.0
    %92 = vmatpush1.msra.mxu0 %v52
    %93 = vmatprep.subr.mxu0 0.0
    %94 = vmatpush2.msra.mxu0 0.0
    %95 = vmatprep.subr.mxu0 0.0
    %96 = vmatpush2.msra.mxu0 0.0
    %97 = vmatprep.subr.mxu0 0.0
    %98 = vmatpush2.msra.mxu0 0.0
    %99 = vmatprep.subr.mxu0 0.0
    %100 = vmatpush2.msra.mxu0 0.0
    %101 = vmatprep.subr.mxu0 0.0
    %102 = vmatpush2.msra.mxu0 0.0
    %103 = vmatprep.subr.mxu0 0.0
    %104 = vmatpush2.msra.mxu0 0.0
    %105 = vmatprep.subr.mxu0 0.0
    %106 = vmatpush2.msra.mxu0 0.0
    %107 = vmatprep.subr.mxu0 0.0
    %108 = vmatpush2.msra.mxu0 0.0
    %109 = vmatprep.subr.mxu0 0.0
    %110 = vmatpush2.msra.mxu0 0.0
    %111 = vmatprep.subr.mxu0 0.0
    %112 = vmatpush2.msra.mxu0 0.0
    %113 = vmatprep.subr.mxu0 0.0
    %114 = vmatpush2.msra.mxu0 0.0
    %115 = vmatprep.subr.mxu0 0.0
    %116 = vmatpush2.msra.mxu0 0.0
    %117 = vmatprep.subr.mxu0 0.0
    %118 = vmatpush2.msra.mxu0 0.0
    %119 = vmatprep.subr.mxu0 0.0
    %120 = vmatpush2.msra.mxu0 0.0
    %121 = vmatprep.subr.mxu0 0.0
    %122 = vmatpush2.msra.mxu0 0.0
    %123 = vmatprep.subr.mxu0 0.0
    %124 = vmatpush2.msra.mxu0 0.0
    %125 = vmatprep.mubr.f32.mxu0 0.0
    %126 = vmatmul.mubr.f32.gmra.mxu0 %v59
    %v127 = vpop.f32.mrf.mxu0
    %v128 = vadd.f32 %v56, %v127
    %v129 = vpop.f32.mrf.mxu0
    %130 = vdwg.mxu0
    %v131 = vld [vmem:[%s3] sm:$0xff]
    %v132 = vld [vmem:[%s3 + $0x8] sm:$0xff]
    %v133 = vld [vmem:[%s3 + $0x10] sm:$0xff]
    %v134 = vld [vmem:[%s3 + $0x18] sm:$0xff]
    %136 = vrot.lane.b32.xlu0 %v128, 64
    %v137 = vpop.permute.xlu0 %136
    %v138 = vsel %vm57, %v137, 0
    %140 = vmatprep.subr.mxu0 0.0
    %141 = vmatpush1.msra.mxu0 0.0
    %142 = vmatprep.subr.mxu0 0.0
    %143 = vmatpush1.msra.mxu0 0.0
    %144 = vmatprep.subr.mxu0 0.0
    %145 = vmatpush1.msra.mxu0 0.0
    %146 = vmatprep.subr.mxu0 0.0
    %147 = vmatpush1.msra.mxu0 0.0
    %148 = vmatprep.subr.mxu0 0.0
    %149 = vmatpush1.msra.mxu0 0.0
    %150 = vmatprep.subr.mxu0 0.0
    %151 = vmatpush1.msra.mxu0 0.0
    %152 = vmatprep.subr.mxu0 0.0
    %153 = vmatpush1.msra.mxu0 0.0
    %154 = vmatprep.subr.mxu0 0.0
    %155 = vmatpush1.msra.mxu0 0.0
    %156 = vmatprep.subr.mxu0 0.0
    %157 = vmatpush1.msra.mxu0 0.0
    %158 = vmatprep.subr.mxu0 0.0
    %159 = vmatpush1.msra.mxu0 0.0
    %160 = vmatprep.subr.mxu0 0.0
    %161 = vmatpush1.msra.mxu0 0.0
    %162 = vmatprep.subr.mxu0 0.0
    %163 = vmatpush1.msra.mxu0 0.0
    %164 = vmatprep.subr.mxu0 0.0
    %165 = vmatpush1.msra.mxu0 %v134
    %166 = vmatprep.subr.mxu0 0.0
    %167 = vmatpush1.msra.mxu0 %v133
    %168 = vmatprep.subr.mxu0 0.0
    %169 = vmatpush1.msra.mxu0 %v132
    %170 = vmatprep.subr.mxu0 0.0
    %171 = vmatpush1.msra.mxu0 %v131
    %172 = vmatprep.subr.mxu0 0.0
    %173 = vmatpush2.msra.mxu0 0.0
    %174 = vmatprep.subr.mxu0 0.0
    %175 = vmatpush2.msra.mxu0 0.0
    %176 = vmatprep.subr.mxu0 0.0
    %177 = vmatpush2.msra.mxu0 0.0
    %178 = vmatprep.subr.mxu0 0.0
    %179 = vmatpush2.msra.mxu0 0.0
    %180 = vmatprep.subr.mxu0 0.0
    %181 = vmatpush2.msra.mxu0 0.0
    %182 = vmatprep.subr.mxu0 0.0
    %183 = vmatpush2.msra.mxu0 0.0
    %184 = vmatprep.subr.mxu0 0.0
    %185 = vmatpush2.msra.mxu0 0.0
    %186 = vmatprep.subr.mxu0 0.0
    %187 = vmatpush2.msra.mxu0 0.0
    %188 = vmatprep.subr.mxu0 0.0
    %189 = vmatpush2.msra.mxu0 0.0
    %190 = vmatprep.subr.mxu0 0.0
    %191 = vmatpush2.msra.mxu0 0.0
    %192 = vmatprep.subr.mxu0 0.0
    %193 = vmatpush2.msra.mxu0 0.0
    %194 = vmatprep.subr.mxu0 0.0
    %195 = vmatpush2.msra.mxu0 0.0
    %196 = vmatprep.subr.mxu0 0.0
    %197 = vmatpush2.msra.mxu0 0.0
    %198 = vmatprep.subr.mxu0 0.0
    %199 = vmatpush2.msra.mxu0 0.0
    %200 = vmatprep.subr.mxu0 0.0
    %201 = vmatpush2.msra.mxu0 0.0
    %202 = vmatprep.subr.mxu0 0.0
    %203 = vmatpush2.msra.mxu0 0.0
    %204 = vmatprep.mubr.f32.mxu0 0.0
    %205 = vmatmul.mubr.f32.gmra.mxu0 %v138
    %v206 = vpop.f32.mrf.mxu0
    %v207 = vadd.f32 %v51, %v206
    %v208 = vpop.f32.mrf.mxu0
    %209 = vdwg.mxu0
    %v210 = vadd.f32 %v50, %v207
    %vm211 = vcmask 253952
    %v212 = vsel %vm211, %v210, 0.0
    %213 = vadd.xlane.f32.xlu0 %v212
    %v214 = vpop.xlane.xlu0 %213
    %v215 = vrcp.pop 32.0
    %v216 = vmul.f32 %v214, %v215
    %v217 = vsub.f32 %v210, %v216
    %v218 = vmul.f32 %v217, %v217
    %v219 = vsel %vm211, %v218, 0.0
    %220 = vadd.xlane.f32.xlu0 %v219
    %v221 = vpop.xlane.xlu0 %220
    %v222 = vmul.f32 %v221, %v215
    %v223 = vadd.f32 %v222, 1e-05
    %v224 = vrsqrt.pop %v223
    %v225 = vmul.f32 %v217, %v224
    %v228 = vunpack.c.l.s4 1966171168
    %v229 = vunpack.c.0.s8 %v228
    %v230 = vlaneseq
    %v231 = vshrl.u32 %v230, 7
    %v232 = vsub.s32 %v229, %v231
    %v233 = vrot.slane %v51, %v232
    %v234 = vcombine.high %v233, %v233
    %v236 = vunpack.c.l.s4 1966171168
    %v237 = vunpack.c.0.s8 %v236
    %v238 = vlaneseq
    %v239 = vshrl.u32 %v238, 7
    %v240 = vsub.s32 %v237, %v239
    %v241 = vrot.slane %v233, %v240
    %v243 = vunpack.c.l.s4 1966171168
    %v244 = vunpack.c.0.s8 %v243
    %v245 = vlaneseq
    %v246 = vshrl.u32 %v245, 7
    %v247 = vsub.s32 %v244, %v246
    %v248 = vrot.slane %v234, %v247
    %v250 = vmul.f32 %v225, %v248
    %v251 = vcombine.high %v241, %v241
    %v253 = vadd.f32 %v250, %v251
    %v254 = vld [vmem:[%s5] sm:$0xff]
    %v255 = vld [vmem:[%s5 + $0x8] sm:$0xff]
    %v256 = vld [vmem:[%s5 + $0x10] sm:$0xff]
    %v257 = vld [vmem:[%s5 + $0x18] sm:$0xff]
    %v258 = vld [vmem:[%s6] sm:$0x1]
    %v260 = vsel %vm57, %v253, 0
    %262 = vmatprep.subr.mxu0 0.0
    %263 = vmatpush1.msra.mxu0 0.0
    %264 = vmatprep.subr.mxu0 0.0
    %265 = vmatpush1.msra.mxu0 0.0
    %266 = vmatprep.subr.mxu0 0.0
    %267 = vmatpush1.msra.mxu0 0.0
    %268 = vmatprep.subr.mxu0 0.0
    %269 = vmatpush1.msra.mxu0 0.0
    %270 = vmatprep.subr.mxu0 0.0
    %271 = vmatpush1.msra.mxu0 0.0
    %272 = vmatprep.subr.mxu0 0.0
    %273 = vmatpush1.msra.mxu0 0.0
    %274 = vmatprep.subr.mxu0 0.0
    %275 = vmatpush1.msra.mxu0 0.0
    %276 = vmatprep.subr.mxu0 0.0
    %277 = vmatpush1.msra.mxu0 0.0
    %278 = vmatprep.subr.mxu0 0.0
    %279 = vmatpush1.msra.mxu0 0.0
    %280 = vmatprep.subr.mxu0 0.0
    %281 = vmatpush1.msra.mxu0 0.0
    %282 = vmatprep.subr.mxu0 0.0
    %283 = vmatpush1.msra.mxu0 0.0
    %284 = vmatprep.subr.mxu0 0.0
    %285 = vmatpush1.msra.mxu0 0.0
    %286 = vmatprep.subr.mxu0 0.0
    %287 = vmatpush1.msra.mxu0 %v257
    %288 = vmatprep.subr.mxu0 0.0
    %289 = vmatpush1.msra.mxu0 %v256
    %290 = vmatprep.subr.mxu0 0.0
    %291 = vmatpush1.msra.mxu0 %v255
    %292 = vmatprep.subr.mxu0 0.0
    %293 = vmatpush1.msra.mxu0 %v254
    %294 = vmatprep.subr.mxu0 0.0
    %295 = vmatpush2.msra.mxu0 0.0
    %296 = vmatprep.subr.mxu0 0.0
    %297 = vmatpush2.msra.mxu0 0.0
    %298 = vmatprep.subr.mxu0 0.0
    %299 = vmatpush2.msra.mxu0 0.0
    %300 = vmatprep.subr.mxu0 0.0
    %301 = vmatpush2.msra.mxu0 0.0
    %302 = vmatprep.subr.mxu0 0.0
    %303 = vmatpush2.msra.mxu0 0.0
    %304 = vmatprep.subr.mxu0 0.0
    %305 = vmatpush2.msra.mxu0 0.0
    %306 = vmatprep.subr.mxu0 0.0
    %307 = vmatpush2.msra.mxu0 0.0
    %308 = vmatprep.subr.mxu0 0.0
    %309 = vmatpush2.msra.mxu0 0.0
    %310 = vmatprep.subr.mxu0 0.0
    %311 = vmatpush2.msra.mxu0 0.0
    %312 = vmatprep.subr.mxu0 0.0
    %313 = vmatpush2.msra.mxu0 0.0
    %314 = vmatprep.subr.mxu0 0.0
    %315 = vmatpush2.msra.mxu0 0.0
    %316 = vmatprep.subr.mxu0 0.0
    %317 = vmatpush2.msra.mxu0 0.0
    %318 = vmatprep.subr.mxu0 0.0
    %319 = vmatpush2.msra.mxu0 0.0
    %320 = vmatprep.subr.mxu0 0.0
    %321 = vmatpush2.msra.mxu0 0.0
    %322 = vmatprep.subr.mxu0 0.0
    %323 = vmatpush2.msra.mxu0 0.0
    %324 = vmatprep.subr.mxu0 0.0
    %325 = vmatpush2.msra.mxu0 0.0
    %326 = vmatprep.mubr.f32.mxu0 0.0
    %327 = vmatmul.mubr.f32.gmra.mxu0 %v260
    %v328 = vpop.f32.mrf.mxu0
    %v329 = vadd.f32 %v258, %v328
    %v330 = vpop.f32.mrf.mxu0
    %331 = vdwg.mxu0
    %v332 = vmax.f32 %v329, 0.0
    %v333 = vld [vmem:[%s7] sm:$0xff]
    %v334 = vld [vmem:[%s7 + $0x8] sm:$0xff]
    %v335 = vld [vmem:[%s7 + $0x10] sm:$0xff]
    %v336 = vld [vmem:[%s7 + $0x18] sm:$0xff]
    %v337 = vld [vmem:[%s7 + $0x20] sm:$0xff]
    %v338 = vld [vmem:[%s7 + $0x28] sm:$0xff]
    %v339 = vld [vmem:[%s7 + $0x30] sm:$0xff]
    %v340 = vld [vmem:[%s7 + $0x38] sm:$0xff]
    %v341 = vrot.slane %v51, 5
    %vm343 = vcmask 523264
    %v345 = vsel %vm343, %v332, 0
    %347 = vmatprep.subr.mxu0 0.0
    %348 = vmatpush1.msra.mxu0 0.0
    %349 = vmatprep.subr.mxu0 0.0
    %350 = vmatpush1.msra.mxu0 0.0
    %351 = vmatprep.subr.mxu0 0.0
    %352 = vmatpush1.msra.mxu0 0.0
    %353 = vmatprep.subr.mxu0 0.0
    %354 = vmatpush1.msra.mxu0 0.0
    %355 = vmatprep.subr.mxu0 0.0
    %356 = vmatpush1.msra.mxu0 0.0
    %357 = vmatprep.subr.mxu0 0.0
    %358 = vmatpush1.msra.mxu0 0.0
    %359 = vmatprep.subr.mxu0 0.0
    %360 = vmatpush1.msra.mxu0 0.0
    %361 = vmatprep.subr.mxu0 0.0
    %362 = vmatpush1.msra.mxu0 0.0
    %363 = vmatprep.subr.mxu0 0.0
    %364 = vmatpush1.msra.mxu0 %v340
    %365 = vmatprep.subr.mxu0 0.0
    %366 = vmatpush1.msra.mxu0 %v339
    %367 = vmatprep.subr.mxu0 0.0
    %368 = vmatpush1.msra.mxu0 %v338
    %369 = vmatprep.subr.mxu0 0.0
    %370 = vmatpush1.msra.mxu0 %v337
    %371 = vmatprep.subr.mxu0 0.0
    %372 = vmatpush1.msra.mxu0 %v336
    %373 = vmatprep.subr.mxu0 0.0
    %374 = vmatpush1.msra.mxu0 %v335
    %375 = vmatprep.subr.mxu0 0.0
    %376 = vmatpush1.msra.mxu0 %v334
    %377 = vmatprep.subr.mxu0 0.0
    %378 = vmatpush1.msra.mxu0 %v333
    %379 = vmatprep.subr.mxu0 0.0
    %380 = vmatpush2.msra.mxu0 0.0
    %381 = vmatprep.subr.mxu0 0.0
    %382 = vmatpush2.msra.mxu0 0.0
    %383 = vmatprep.subr.mxu0 0.0
    %384 = vmatpush2.msra.mxu0 0.0
    %385 = vmatprep.subr.mxu0 0.0
    %386 = vmatpush2.msra.mxu0 0.0
    %387 = vmatprep.subr.mxu0 0.0
    %388 = vmatpush2.msra.mxu0 0.0
    %389 = vmatprep.subr.mxu0 0.0
    %390 = vmatpush2.msra.mxu0 0.0
    %391 = vmatprep.subr.mxu0 0.0
    %392 = vmatpush2.msra.mxu0 0.0
    %393 = vmatprep.subr.mxu0 0.0
    %394 = vmatpush2.msra.mxu0 0.0
    %395 = vmatprep.subr.mxu0 0.0
    %396 = vmatpush2.msra.mxu0 0.0
    %397 = vmatprep.subr.mxu0 0.0
    %398 = vmatpush2.msra.mxu0 0.0
    %399 = vmatprep.subr.mxu0 0.0
    %400 = vmatpush2.msra.mxu0 0.0
    %401 = vmatprep.subr.mxu0 0.0
    %402 = vmatpush2.msra.mxu0 0.0
    %403 = vmatprep.subr.mxu0 0.0
    %404 = vmatpush2.msra.mxu0 0.0
    %405 = vmatprep.subr.mxu0 0.0
    %406 = vmatpush2.msra.mxu0 0.0
    %407 = vmatprep.subr.mxu0 0.0
    %408 = vmatpush2.msra.mxu0 0.0
    %409 = vmatprep.subr.mxu0 0.0
    %410 = vmatpush2.msra.mxu0 0.0
    %411 = vmatprep.mubr.f32.mxu0 0.0
    %412 = vmatmul.mubr.f32.gmra.mxu0 %v345
    %v413 = vpop.f32.mrf.mxu0
    %v414 = vadd.f32 %v341, %v413
    %v415 = vpop.f32.mrf.mxu0
    %416 = vdwg.mxu0
    %v417 = vadd.f32 %v253, %v414
    %v418 = vsel %vm211, %v417, 0.0
    %419 = vadd.xlane.f32.xlu0 %v418
    %v420 = vpop.xlane.xlu0 %419
    %v421 = vmul.f32 %v420, %v215
    %v422 = vsub.f32 %v417, %v421
    %v423 = vmul.f32 %v422, %v422
    %v424 = vsel %vm211, %v423, 0.0
    %425 = vadd.xlane.f32.xlu0 %v424
    %v426 = vpop.xlane.xlu0 %425
    %v427 = vmul.f32 %v426, %v215
    %v428 = vadd.f32 %v427, 1e-05
    %v429 = vrsqrt.pop %v428
    %v430 = vmul.f32 %v422, %v429
    %v431 = vcombine.high %v248, %v248
    %v433 = vmul.f32 %v430, %v431
    %v434 = vcombine.high %v51, %v51
    %v436 = vunpack.c.l.s4 1966171168
    %v437 = vunpack.c.0.s8 %v436
    %v438 = vlaneseq
    %v439 = vshrl.u32 %v438, 7
    %v440 = vsub.s32 %v437, %v439
    %v441 = vrot.slane %v434, %v440
    %v443 = vunpack.c.l.s4 1966171168
    %v444 = vunpack.c.0.s8 %v443
    %v445 = vlaneseq
    %v446 = vshrl.u32 %v445, 7
    %v447 = vsub.s32 %v444, %v446
    %v448 = vrot.slane %v441, %v447
    %v450 = vadd.f32 %v433, %v448
    %s451 = scalar_lea.vmem %s4, 8
    %v452 = vld [vmem:[%s451] sm:$0x3f]
    %s453 = scalar_lea.vmem %s1, 32
    %v454 = vld [vmem:[%s453] sm:$0xff]
    %v455 = vld [vmem:[%s453 + $0x8] sm:$0xff]
    %v456 = vld [vmem:[%s453 + $0x10] sm:$0xff]
    %v457 = vld [vmem:[%s453 + $0x18] sm:$0xff]
    %s458 = scalar_lea.vmem %s2, 1
    %v459 = vld [vmem:[%s458] sm:$0x1]
    %v461 = vsel %vm57, %v450, 0
    %463 = vmatprep.subr.mxu0 0.0
    %464 = vmatpush1.msra.mxu0 0.0
    %465 = vmatprep.subr.mxu0 0.0
    %466 = vmatpush1.msra.mxu0 0.0
    %467 = vmatprep.subr.mxu0 0.0
    %468 = vmatpush1.msra.mxu0 0.0
    %469 = vmatprep.subr.mxu0 0.0
    %470 = vmatpush1.msra.mxu0 0.0
    %471 = vmatprep.subr.mxu0 0.0
    %472 = vmatpush1.msra.mxu0 0.0
    %473 = vmatprep.subr.mxu0 0.0
    %474 = vmatpush1.msra.mxu0 0.0
    %475 = vmatprep.subr.mxu0 0.0
    %476 = vmatpush1.msra.mxu0 0.0
    %477 = vmatprep.subr.mxu0 0.0
    %478 = vmatpush1.msra.mxu0 0.0
    %479 = vmatprep.subr.mxu0 0.0
    %480 = vmatpush1.msra.mxu0 0.0
    %481 = vmatprep.subr.mxu0 0.0
    %482 = vmatpush1.msra.mxu0 0.0
    %483 = vmatprep.subr.mxu0 0.0
    %484 = vmatpush1.msra.mxu0 0.0
    %485 = vmatprep.subr.mxu0 0.0
    %486 = vmatpush1.msra.mxu0 0.0
    %487 = vmatprep.subr.mxu0 0.0
    %488 = vmatpush1.msra.mxu0 %v457
    %489 = vmatprep.subr.mxu0 0.0
    %490 = vmatpush1.msra.mxu0 %v456
    %491 = vmatprep.subr.mxu0 0.0
    %492 = vmatpush1.msra.mxu0 %v455
    %493 = vmatprep.subr.mxu0 0.0
    %494 = vmatpush1.msra.mxu0 %v454
    %495 = vmatprep.subr.mxu0 0.0
    %496 = vmatpush2.msra.mxu0 0.0
    %497 = vmatprep.subr.mxu0 0.0
    %498 = vmatpush2.msra.mxu0 0.0
    %499 = vmatprep.subr.mxu0 0.0
    %500 = vmatpush2.msra.mxu0 0.0
    %501 = vmatprep.subr.mxu0 0.0
    %502 = vmatpush2.msra.mxu0 0.0
    %503 = vmatprep.subr.mxu0 0.0
    %504 = vmatpush2.msra.mxu0 0.0
    %505 = vmatprep.subr.mxu0 0.0
    %506 = vmatpush2.msra.mxu0 0.0
    %507 = vmatprep.subr.mxu0 0.0
    %508 = vmatpush2.msra.mxu0 0.0
    %509 = vmatprep.subr.mxu0 0.0
    %510 = vmatpush2.msra.mxu0 0.0
    %511 = vmatprep.subr.mxu0 0.0
    %512 = vmatpush2.msra.mxu0 0.0
    %513 = vmatprep.subr.mxu0 0.0
    %514 = vmatpush2.msra.mxu0 0.0
    %515 = vmatprep.subr.mxu0 0.0
    %516 = vmatpush2.msra.mxu0 0.0
    %517 = vmatprep.subr.mxu0 0.0
    %518 = vmatpush2.msra.mxu0 0.0
    %519 = vmatprep.subr.mxu0 0.0
    %520 = vmatpush2.msra.mxu0 0.0
    %521 = vmatprep.subr.mxu0 0.0
    %522 = vmatpush2.msra.mxu0 0.0
    %523 = vmatprep.subr.mxu0 0.0
    %524 = vmatpush2.msra.mxu0 0.0
    %525 = vmatprep.subr.mxu0 0.0
    %526 = vmatpush2.msra.mxu0 0.0
    %527 = vmatprep.mubr.f32.mxu0 0.0
    %528 = vmatmul.mubr.f32.gmra.mxu0 %v461
    %v529 = vpop.f32.mrf.mxu0
    %v530 = vadd.f32 %v459, %v529
    %v531 = vpop.f32.mrf.mxu0
    %532 = vdwg.mxu0
    %s533 = scalar_lea.vmem %s3, 32
    %v534 = vld [vmem:[%s533] sm:$0xff]
    %v535 = vld [vmem:[%s533 + $0x8] sm:$0xff]
    %v536 = vld [vmem:[%s533 + $0x10] sm:$0xff]
    %v537 = vld [vmem:[%s533 + $0x18] sm:$0xff]
    %539 = vrot.lane.b32.xlu0 %v530, 64
    %v540 = vpop.permute.xlu0 %539
    %v541 = vsel %vm57, %v540, 0
    %543 = vmatprep.subr.mxu0 0.0
    %544 = vmatpush1.msra.mxu0 0.0
    %545 = vmatprep.subr.mxu0 0.0
    %546 = vmatpush1.msra.mxu0 0.0
    %547 = vmatprep.subr.mxu0 0.0
    %548 = vmatpush1.msra.mxu0 0.0
    %549 = vmatprep.subr.mxu0 0.0
    %550 = vmatpush1.msra.mxu0 0.0
    %551 = vmatprep.subr.mxu0 0.0
    %552 = vmatpush1.msra.mxu0 0.0
    %553 = vmatprep.subr.mxu0 0.0
    %554 = vmatpush1.msra.mxu0 0.0
    %555 = vmatprep.subr.mxu0 0.0
    %556 = vmatpush1.msra.mxu0 0.0
    %557 = vmatprep.subr.mxu0 0.0
    %558 = vmatpush1.msra.mxu0 0.0
    %559 = vmatprep.subr.mxu0 0.0
    %560 = vmatpush1.msra.mxu0 0.0
    %561 = vmatprep.subr.mxu0 0.0
    %562 = vmatpush1.msra.mxu0 0.0
    %563 = vmatprep.subr.mxu0 0.0
    %564 = vmatpush1.msra.mxu0 0.0
    %565 = vmatprep.subr.mxu0 0.0
    %566 = vmatpush1.msra.mxu0 0.0
    %567 = vmatprep.subr.mxu0 0.0
    %568 = vmatpush1.msra.mxu0 %v537
    %569 = vmatprep.subr.mxu0 0.0
    %570 = vmatpush1.msra.mxu0 %v536
    %571 = vmatprep.subr.mxu0 0.0
    %572 = vmatpush1.msra.mxu0 %v535
    %573 = vmatprep.subr.mxu0 0.0
    %574 = vmatpush1.msra.mxu0 %v534
    %575 = vmatprep.subr.mxu0 0.0
    %576 = vmatpush2.msra.mxu0 0.0
    %577 = vmatprep.subr.mxu0 0.0
    %578 = vmatpush2.msra.mxu0 0.0
    %579 = vmatprep.subr.mxu0 0.0
    %580 = vmatpush2.msra.mxu0 0.0
    %581 = vmatprep.subr.mxu0 0.0
    %582 = vmatpush2.msra.mxu0 0.0
    %583 = vmatprep.subr.mxu0 0.0
    %584 = vmatpush2.msra.mxu0 0.0
    %585 = vmatprep.subr.mxu0 0.0
    %586 = vmatpush2.msra.mxu0 0.0
    %587 = vmatprep.subr.mxu0 0.0
    %588 = vmatpush2.msra.mxu0 0.0
    %589 = vmatprep.subr.mxu0 0.0
    %590 = vmatpush2.msra.mxu0 0.0
    %591 = vmatprep.subr.mxu0 0.0
    %592 = vmatpush2.msra.mxu0 0.0
    %593 = vmatprep.subr.mxu0 0.0
    %594 = vmatpush2.msra.mxu0 0.0
    %595 = vmatprep.subr.mxu0 0.0
    %596 = vmatpush2.msra.mxu0 0.0
    %597 = vmatprep.subr.mxu0 0.0
    %598 = vmatpush2.msra.mxu0 0.0
    %599 = vmatprep.subr.mxu0 0.0
    %600 = vmatpush2.msra.mxu0 0.0
    %601 = vmatprep.subr.mxu0 0.0
    %602 = vmatpush2.msra.mxu0 0.0
    %603 = vmatprep.subr.mxu0 0.0
    %604 = vmatpush2.msra.mxu0 0.0
    %605 = vmatprep.subr.mxu0 0.0
    %606 = vmatpush2.msra.mxu0 0.0
    %607 = vmatprep.mubr.f32.mxu0 0.0
    %608 = vmatmul.mubr.f32.gmra.mxu0 %v541
    %v609 = vpop.f32.mrf.mxu0
    %v610 = vadd.f32 %v452, %v609
    %v611 = vpop.f32.mrf.mxu0
    %612 = vdwg.mxu0
    %v613 = vadd.f32 %v450, %v610
    %v614 = vsel %vm211, %v613, 0.0
    %615 = vadd.xlane.f32.xlu0 %v614
    %v616 = vpop.xlane.xlu0 %615
    %v617 = vmul.f32 %v616, %v215
    %v618 = vsub.f32 %v613, %v617
    %v619 = vmul.f32 %v618, %v618
    %v620 = vsel %vm211, %v619, 0.0
    %621 = vadd.xlane.f32.xlu0 %v620
    %v622 = vpop.xlane.xlu0 %621
    %v623 = vmul.f32 %v622, %v215
    %v624 = vadd.f32 %v623, 1e-05
    %v625 = vrsqrt.pop %v624
    %v626 = vmul.f32 %v618, %v625
    %v629 = vunpack.c.l.s4 1966171168
    %v630 = vunpack.c.0.s8 %v629
    %v631 = vlaneseq
    %v632 = vshrl.u32 %v631, 7
    %v633 = vsub.s32 %v630, %v632
    %v634 = vrot.slane %v452, %v633
    %v635 = vcombine.high %v634, %v634
    %v637 = vunpack.c.l.s4 1966171168
    %v638 = vunpack.c.0.s8 %v637
    %v639 = vlaneseq
    %v640 = vshrl.u32 %v639, 7
    %v641 = vsub.s32 %v638, %v640
    %v642 = vrot.slane %v634, %v641
    %v644 = vunpack.c.l.s4 1966171168
    %v645 = vunpack.c.0.s8 %v644
    %v646 = vlaneseq
    %v647 = vshrl.u32 %v646, 7
    %v648 = vsub.s32 %v645, %v647
    %v649 = vrot.slane %v635, %v648
    %v651 = vmul.f32 %v626, %v649
    %v652 = vcombine.high %v642, %v642
    %v654 = vadd.f32 %v651, %v652
    %s655 = scalar_lea.vmem %s5, 32
    %v656 = vld [vmem:[%s655] sm:$0xff]
    %v657 = vld [vmem:[%s655 + $0x8] sm:$0xff]
    %v658 = vld [vmem:[%s655 + $0x10] sm:$0xff]
    %v659 = vld [vmem:[%s655 + $0x18] sm:$0xff]
    %s660 = scalar_lea.vmem %s6, 1
    %v661 = vld [vmem:[%s660] sm:$0x1]
    %v663 = vsel %vm57, %v654, 0
    %665 = vmatprep.subr.mxu0 0.0
    %666 = vmatpush1.msra.mxu0 0.0
    %667 = vmatprep.subr.mxu0 0.0
    %668 = vmatpush1.msra.mxu0 0.0
    %669 = vmatprep.subr.mxu0 0.0
    %670 = vmatpush1.msra.mxu0 0.0
    %671 = vmatprep.subr.mxu0 0.0
    %672 = vmatpush1.msra.mxu0 0.0
    %673 = vmatprep.subr.mxu0 0.0
    %674 = vmatpush1.msra.mxu0 0.0
    %675 = vmatprep.subr.mxu0 0.0
    %676 = vmatpush1.msra.mxu0 0.0
    %677 = vmatprep.subr.mxu0 0.0
    %678 = vmatpush1.msra.mxu0 0.0
    %679 = vmatprep.subr.mxu0 0.0
    %680 = vmatpush1.msra.mxu0 0.0
    %681 = vmatprep.subr.mxu0 0.0
    %682 = vmatpush1.msra.mxu0 0.0
    %683 = vmatprep.subr.mxu0 0.0
    %684 = vmatpush1.msra.mxu0 0.0
    %685 = vmatprep.subr.mxu0 0.0
    %686 = vmatpush1.msra.mxu0 0.0
    %687 = vmatprep.subr.mxu0 0.0
    %688 = vmatpush1.msra.mxu0 0.0
    %689 = vmatprep.subr.mxu0 0.0
    %690 = vmatpush1.msra.mxu0 %v659
    %691 = vmatprep.subr.mxu0 0.0
    %692 = vmatpush1.msra.mxu0 %v658
    %693 = vmatprep.subr.mxu0 0.0
    %694 = vmatpush1.msra.mxu0 %v657
    %695 = vmatprep.subr.mxu0 0.0
    %696 = vmatpush1.msra.mxu0 %v656
    %697 = vmatprep.subr.mxu0 0.0
    %698 = vmatpush2.msra.mxu0 0.0
    %699 = vmatprep.subr.mxu0 0.0
    %700 = vmatpush2.msra.mxu0 0.0
    %701 = vmatprep.subr.mxu0 0.0
    %702 = vmatpush2.msra.mxu0 0.0
    %703 = vmatprep.subr.mxu0 0.0
    %704 = vmatpush2.msra.mxu0 0.0
    %705 = vmatprep.subr.mxu0 0.0
    %706 = vmatpush2.msra.mxu0 0.0
    %707 = vmatprep.subr.mxu0 0.0
    %708 = vmatpush2.msra.mxu0 0.0
    %709 = vmatprep.subr.mxu0 0.0
    %710 = vmatpush2.msra.mxu0 0.0
    %711 = vmatprep.subr.mxu0 0.0
    %712 = vmatpush2.msra.mxu0 0.0
    %713 = vmatprep.subr.mxu0 0.0
    %714 = vmatpush2.msra.mxu0 0.0
    %715 = vmatprep.subr.mxu0 0.0
    %716 = vmatpush2.msra.mxu0 0.0
    %717 = vmatprep.subr.mxu0 0.0
    %718 = vmatpush2.msra.mxu0 0.0
    %719 = vmatprep.subr.mxu0 0.0
    %720 = vmatpush2.msra.mxu0 0.0
    %721 = vmatprep.subr.mxu0 0.0
    %722 = vmatpush2.msra.mxu0 0.0
    %723 = vmatprep.subr.mxu0 0.0
    %724 = vmatpush2.msra.mxu0 0.0
    %725 = vmatprep.subr.mxu0 0.0
    %726 = vmatpush2.msra.mxu0 0.0
    %727 = vmatprep.subr.mxu0 0.0
    %728 = vmatpush2.msra.mxu0 0.0
    %729 = vmatprep.mubr.f32.mxu0 0.0
    %730 = vmatmul.mubr.f32.gmra.mxu0 %v663
    %v731 = vpop.f32.mrf.mxu0
    %v732 = vadd.f32 %v661, %v731
    %v733 = vpop.f32.mrf.mxu0
    %734 = vdwg.mxu0
    %v735 = vmax.f32 %v732, 0.0
    %s736 = scalar_lea.vmem %s7, 64
    %v737 = vld [vmem:[%s736] sm:$0xff]
    %v738 = vld [vmem:[%s736 + $0x8] sm:$0xff]
    %v739 = vld [vmem:[%s736 + $0x10] sm:$0xff]
    %v740 = vld [vmem:[%s736 + $0x18] sm:$0xff]
    %v741 = vld [vmem:[%s736 + $0x20] sm:$0xff]
    %v742 = vld [vmem:[%s736 + $0x28] sm:$0xff]
    %v743 = vld [vmem:[%s736 + $0x30] sm:$0xff]
    %v744 = vld [vmem:[%s736 + $0x38] sm:$0xff]
    %v745 = vrot.slane %v452, 5
    %v748 = vsel %vm343, %v735, 0
    %750 = vmatprep.subr.mxu0 0.0
    %751 = vmatpush1.msra.mxu0 0.0
    %752 = vmatprep.subr.mxu0 0.0
    %753 = vmatpush1.msra.mxu0 0.0
    %754 = vmatprep.subr.mxu0 0.0
    %755 = vmatpush1.msra.mxu0 0.0
    %756 = vmatprep.subr.mxu0 0.0
    %757 = vmatpush1.msra.mxu0 0.0
    %758 = vmatprep.subr.mxu0 0.0
    %759 = vmatpush1.msra.mxu0 0.0
    %760 = vmatprep.subr.mxu0 0.0
    %761 = vmatpush1.msra.mxu0 0.0
    %762 = vmatprep.subr.mxu0 0.0
    %763 = vmatpush1.msra.mxu0 0.0
    %764 = vmatprep.subr.mxu0 0.0
    %765 = vmatpush1.msra.mxu0 0.0
    %766 = vmatprep.subr.mxu0 0.0
    %767 = vmatpush1.msra.mxu0 %v744
    %768 = vmatprep.subr.mxu0 0.0
    %769 = vmatpush1.msra.mxu0 %v743
    %770 = vmatprep.subr.mxu0 0.0
    %771 = vmatpush1.msra.mxu0 %v742
    %772 = vmatprep.subr.mxu0 0.0
    %773 = vmatpush1.msra.mxu0 %v741
    %774 = vmatprep.subr.mxu0 0.0
    %775 = vmatpush1.msra.mxu0 %v740
    %776 = vmatprep.subr.mxu0 0.0
    %777 = vmatpush1.msra.mxu0 %v739
    %778 = vmatprep.subr.mxu0 0.0
    %779 = vmatpush1.msra.mxu0 %v738
    %780 = vmatprep.subr.mxu0 0.0
    %781 = vmatpush1.msra.mxu0 %v737
    %782 = vmatprep.subr.mxu0 0.0
    %783 = vmatpush2.msra.mxu0 0.0
    %784 = vmatprep.subr.mxu0 0.0
    %785 = vmatpush2.msra.mxu0 0.0
    %786 = vmatprep.subr.mxu0 0.0
    %787 = vmatpush2.msra.mxu0 0.0
    %788 = vmatprep.subr.mxu0 0.0
    %789 = vmatpush2.msra.mxu0 0.0
    %790 = vmatprep.subr.mxu0 0.0
    %791 = vmatpush2.msra.mxu0 0.0
    %792 = vmatprep.subr.mxu0 0.0
    %793 = vmatpush2.msra.mxu0 0.0
    %794 = vmatprep.subr.mxu0 0.0
    %795 = vmatpush2.msra.mxu0 0.0
    %796 = vmatprep.subr.mxu0 0.0
    %797 = vmatpush2.msra.mxu0 0.0
    %798 = vmatprep.subr.mxu0 0.0
    %799 = vmatpush2.msra.mxu0 0.0
    %800 = vmatprep.subr.mxu0 0.0
    %801 = vmatpush2.msra.mxu0 0.0
    %802 = vmatprep.subr.mxu0 0.0
    %803 = vmatpush2.msra.mxu0 0.0
    %804 = vmatprep.subr.mxu0 0.0
    %805 = vmatpush2.msra.mxu0 0.0
    %806 = vmatprep.subr.mxu0 0.0
    %807 = vmatpush2.msra.mxu0 0.0
    %808 = vmatprep.subr.mxu0 0.0
    %809 = vmatpush2.msra.mxu0 0.0
    %810 = vmatprep.subr.mxu0 0.0
    %811 = vmatpush2.msra.mxu0 0.0
    %812 = vmatprep.subr.mxu0 0.0
    %813 = vmatpush2.msra.mxu0 0.0
    %814 = vmatprep.mubr.f32.mxu0 0.0
    %815 = vmatmul.mubr.f32.gmra.mxu0 %v748
    %v816 = vpop.f32.mrf.mxu0
    %v817 = vadd.f32 %v745, %v816
    %v818 = vpop.f32.mrf.mxu0
    %819 = vdwg.mxu0
    %v820 = vadd.f32 %v654, %v817
    %v821 = vsel %vm211, %v820, 0.0
    %822 = vadd.xlane.f32.xlu0 %v821
    %v823 = vpop.xlane.xlu0 %822
    %v824 = vmul.f32 %v823, %v215
    %v825 = vsub.f32 %v820, %v824
    %v826 = vmul.f32 %v825, %v825
    %v827 = vsel %vm211, %v826, 0.0
    %828 = vadd.xlane.f32.xlu0 %v827
    %v829 = vpop.xlane.xlu0 %828
    %v830 = vmul.f32 %v829, %v215
    %v831 = vadd.f32 %v830, 1e-05
    %v832 = vrsqrt.pop %v831
    %v833 = vmul.f32 %v825, %v832
    %v834 = vcombine.high %v649, %v649
    %v836 = vmul.f32 %v833, %v834
    %v837 = vcombine.high %v452, %v452
    %v839 = vunpack.c.l.s4 1966171168
    %v840 = vunpack.c.0.s8 %v839
    %v841 = vlaneseq
    %v842 = vshrl.u32 %v841, 7
    %v843 = vsub.s32 %v840, %v842
    %v844 = vrot.slane %v837, %v843
    %v846 = vunpack.c.l.s4 1966171168
    %v847 = vunpack.c.0.s8 %v846
    %v848 = vlaneseq
    %v849 = vshrl.u32 %v848, 7
    %v850 = vsub.s32 %v847, %v849
    %v851 = vrot.slane %v844, %v850
    %v853 = vadd.f32 %v836, %v851
    %v854 = vld [vmem:[#allocation2] sm:$0xff]
    %v855 = vld [vmem:[#allocation2 + $0x8] sm:$0xff]
    %v856 = vld [vmem:[#allocation2 + $0x10] sm:$0xff]
    %v857 = vld [vmem:[#allocation2 + $0x18] sm:$0xff]
    %v858 = vld [vmem:[#allocation2 + $0x20] sm:$0xff]
    %v859 = vld [vmem:[#allocation2 + $0x28] sm:$0xff]
    %v860 = vld [vmem:[#allocation2 + $0x30] sm:$0xff]
    %v861 = vld [vmem:[#allocation2 + $0x38] sm:$0xff]
    %v862 = vld [vmem:[%s9] sm:$0x3]
    %v864 = vlaneseq
    %v865 = vshrl.u32 %v864, 7
    %v866 = vsub.s32 0, %v865
    %v867 = vrot.slane %v862, %v866
    %v868 = vlaneseq
    %v869 = vshrl.u32 %v868, 7
    %v870 = vsub.s32 1, %v869
    %v871 = vrot.slane %v862, %v870
    %v875 = vsel %vm57, %v853, 0
    %877 = vmatprep.subr.mxu0 0.0
    %878 = vmatpush1.msra.mxu0 0.0
    %879 = vmatprep.subr.mxu0 0.0
    %880 = vmatpush1.msra.mxu0 0.0
    %881 = vmatprep.subr.mxu0 0.0
    %882 = vmatpush1.msra.mxu0 0.0
    %883 = vmatprep.subr.mxu0 0.0
    %884 = vmatpush1.msra.mxu0 0.0
    %885 = vmatprep.subr.mxu0 0.0
    %886 = vmatpush1.msra.mxu0 0.0
    %887 = vmatprep.subr.mxu0 0.0
    %888 = vmatpush1.msra.mxu0 0.0
    %889 = vmatprep.subr.mxu0 0.0
    %890 = vmatpush1.msra.mxu0 0.0
    %891 = vmatprep.subr.mxu0 0.0
    %892 = vmatpush1.msra.mxu0 0.0
    %893 = vmatprep.subr.mxu0 0.0
    %894 = vmatpush1.msra.mxu0 0.0
    %895 = vmatprep.subr.mxu0 0.0
    %896 = vmatpush1.msra.mxu0 0.0
    %897 = vmatprep.subr.mxu0 0.0
    %898 = vmatpush1.msra.mxu0 0.0
    %899 = vmatprep.subr.mxu0 0.0
    %900 = vmatpush1.msra.mxu0 0.0
    %901 = vmatprep.subr.mxu0 %v861
    %902 = vmatpush1.msra.mxu0 %v860
    %903 = vmatprep.subr.mxu0 %v859
    %904 = vmatpush1.msra.mxu0 %v858
    %905 = vmatprep.subr.mxu0 %v857
    %906 = vmatpush1.msra.mxu0 %v856
    %907 = vmatprep.subr.mxu0 %v855
    %908 = vmatpush1.msra.mxu0 %v854
    %909 = vmatprep.subr.mxu0 0.0
    %910 = vmatpush2.msra.mxu0 0.0
    %911 = vmatprep.subr.mxu0 0.0
    %912 = vmatpush2.msra.mxu0 0.0
    %913 = vmatprep.subr.mxu0 0.0
    %914 = vmatpush2.msra.mxu0 0.0
    %915 = vmatprep.subr.mxu0 0.0
    %916 = vmatpush2.msra.mxu0 0.0
    %917 = vmatprep.subr.mxu0 0.0
    %918 = vmatpush2.msra.mxu0 0.0
    %919 = vmatprep.subr.mxu0 0.0
    %920 = vmatpush2.msra.mxu0 0.0
    %921 = vmatprep.subr.mxu0 0.0
    %922 = vmatpush2.msra.mxu0 0.0
    %923 = vmatprep.subr.mxu0 0.0
    %924 = vmatpush2.msra.mxu0 0.0
    %925 = vmatprep.subr.mxu0 0.0
    %926 = vmatpush2.msra.mxu0 0.0
    %927 = vmatprep.subr.mxu0 0.0
    %928 = vmatpush2.msra.mxu0 0.0
    %929 = vmatprep.subr.mxu0 0.0
    %930 = vmatpush2.msra.mxu0 0.0
    %931 = vmatprep.subr.mxu0 0.0
    %932 = vmatpush2.msra.mxu0 0.0
    %933 = vmatprep.subr.mxu0 0.0
    %934 = vmatpush2.msra.mxu0 0.0
    %935 = vmatprep.subr.mxu0 0.0
    %936 = vmatpush2.msra.mxu0 0.0
    %937 = vmatprep.subr.mxu0 0.0
    %938 = vmatpush2.msra.mxu0 0.0
    %939 = vmatprep.subr.mxu0 0.0
    %940 = vmatpush2.msra.mxu0 0.0
    %941 = vmatprep.mubr.f32.mxu0 0.0
    %942 = vmatmul.mubr.f32.gmra.mxu0 %v875
    %v943 = vpop.f32.mrf.mxu0
    %v944 = vadd.f32 %v867, %v943
    %v945 = vpop.f32.mrf.mxu0
    %v946 = vadd.f32 %v871, %v945
    %947 = vdwg.mxu0
    %v950 = vcombine.low %v944, %v946
    %v952 = vunpack.c.l.s4 1966171168
    %v953 = vunpack.c.0.s8 %v952
    %v954 = vlaneseq
    %v955 = vshrl.u32 %v954, 7
    %v956 = vsub.s32 %v953, %v955
    %v957 = vrot.slane %v950, %v956
    %v959 = vunpack.c.l.s4 1966171168
    %v960 = vunpack.c.0.s8 %v959
    %v961 = vlaneseq
    %v962 = vshrl.u32 %v961, 7
    %v963 = vsub.s32 %v960, %v962
    %v964 = vrot.slane %v957, %v963
    %v966 = vlaneseq
    %vm967 = vcmp.ge.s32.totalorder %v966, 0
    %vm968 = vcmp.lt.s32.totalorder %v966, 256
    %vm969 = vmand %vm967, %vm968
    %970 = vst.msk [vmem:[#allocation5] sm:$0x3] %vm969, %v964
    // Predicated region
    $region46: #{tpu_custom_call.1} parent=1 // pred_check
      _
    $region47: #{tpu_custom_call.1} parent=1 // pred_check_branch
      %972 = sbr.rel (0) target = $region49
    $region48: #{tpu_custom_call.1} parent=1 // pred_region
      %s974 = ssub.s32 32, 32
      %975 = vsyncadd [#allocation4], %s974
      %s977 = sshll.u32 [#allocation5], 4
      %s978 = int_to_ptr.vmem [resolvable:$true] %s977
      %980 = dma.vmem_to_hbm [thread:$0]  %s978, 32, %s10, [#allocation4]
    $region49: #{tpu_custom_call.1} parent=1 // pred_fallthru
      _
    // Predicated region
    $region50: #{tpu_custom_call.1} parent=1 // pred_check
      _
    $region51: #{tpu_custom_call.1} parent=1 // pred_check_branch
      %982 = sbr.rel (0) target = $region53
    $region52: #{tpu_custom_call.1} parent=1 // pred_region
      %983 = dma.done [#allocation4], 32
    $region53: #{tpu_custom_call.1} parent=1 // pred_fallthru
      _
    %984 = vsyncpa [#allocation3], 1
    %985 = vsyncpa [#allocation4], 1

</llo_original>
